<compile_context>
chip_gen: v7x
topology: tpu7x:2x2x1
jax: 0.10.0
libtpu: 0.0.40
codegen_flags: <defaults>
</compile_context>

<pallas_src>
import functools

import jax
import jax.numpy as jnp
from jax.experimental import pallas as pl
from jax.experimental.pallas import tpu as pltpu

EPSILON = 1e-5
_LANE = 128
_SUBLANE = 8


def _round_up(x, m):
    return ((x + m - 1) // m) * m


def _cdiv(a, b):
    return (a + b - 1) // b


def _dcloss_kernel(o_ref, t_ref, num_ref, en_ref, *scratch,
                   batch, feat, tile_b, tile_f, n_b, mask_rows, mask_cols):
    """One grid step over a (TILE_B, TILE_F) block of both inputs."""
    fi = pl.program_id(0)
    bi = pl.program_id(1)

    o = o_ref[...].astype(jnp.float32)          # [TILE_B, TILE_F]
    t = t_ref[...].astype(jnp.float32)

    # Rows past the true batch (ragged last B tile) hold garbage: zero them
    # before the batch reduction.
    if mask_rows:
        row = jax.lax.broadcasted_iota(jnp.int32, (tile_b, 1), 0)
        rmask = (bi * tile_b + row) < batch
        o = jnp.where(rmask, o, 0.0)
        t = jnp.where(rmask, t, 0.0)

    col_o = jnp.sum(o, axis=0, keepdims=True)   # [1, TILE_F] = sum_b o
    col_t = jnp.sum(t, axis=0, keepdims=True)   # [1, TILE_F] = sum_b t
    col_e = jnp.sum(t * t, axis=0, keepdims=True)

    # Lanes past the true feature count (ragged last F tile) hold garbage:
    # mask them post-reduction (cheaper than masking the full block).
    if mask_cols:
        lane = jax.lax.broadcasted_iota(jnp.int32, (1, tile_f), 1)
        cmask = (fi * tile_f + lane) < feat
        col_o = jnp.where(cmask, col_o, 0.0)
        col_t = jnp.where(cmask, col_t, 0.0)
        col_e = jnp.where(cmask, col_e, 0.0)

    if n_b == 1:
        # Whole batch in one block: emit this F tile's partials directly.
        diff = col_t - col_o
        num_ref[0, 0] = jnp.sum(diff * diff)
        en_ref[0, 0] = jnp.sum(col_e)
    else:
        col_o_acc, col_t_acc, col_e_acc = scratch

        @pl.when(bi == 0)
        def _():
            col_o_acc[...] = jnp.zeros_like(col_o_acc)
            col_t_acc[...] = jnp.zeros_like(col_t_acc)
            col_e_acc[...] = jnp.zeros_like(col_e_acc)

        col_o_acc[...] += col_o
        col_t_acc[...] += col_t
        col_e_acc[...] += col_e

        @pl.when(bi == n_b - 1)
        def _():
            diff = col_t_acc[...] - col_o_acc[...]
            num_ref[0, 0] = jnp.sum(diff * diff)
            en_ref[0, 0] = jnp.sum(col_e_acc[...])


def _vmem_budgets():
    """Generation-aware (vmem_limit_bytes, double-buffered input budget)."""
    try:
        vmem_cap = int(pltpu.get_tpu_info().vmem_capacity_bytes)
    except Exception:
        vmem_cap = 64 * 1024 * 1024        # conservative fallback (v7x-sized)
    # v5e/v6e (128 MiB physical): limit 96 MiB, input working set up to 48 MiB.
    # v7x (64 MiB per TC):        limit 48 MiB, input working set up to 40 MiB.
    vmem_limit = min((vmem_cap * 3) // 4, 96 * 1024 * 1024)
    budget = min(vmem_limit - 8 * 1024 * 1024, 48 * 1024 * 1024)
    return vmem_limit, budget


def _choose_tiles(b, f, itemsize, budget, max_tile_b, max_tile_f):
    """Pick (tile_b, tile_f): 2 operands x 2 buffers x block + scratch <= budget."""
    f_lanes = _round_up(f, _LANE)
    b_cap = b if max_tile_b is None else max(1, min(b, int(max_tile_b)))

    # Per-lane cost of a full-batch block (+ slack for f32 accumulators).
    full_b_per_lane = 4 * b * itemsize + 16
    if b_cap == b and full_b_per_lane * _LANE <= budget:
        tile_b = b
        tile_f = min(f_lanes,
                     max(_LANE, (budget // full_b_per_lane) // _LANE * _LANE))
    else:
        # Tall input (or forced cap): tile over B as well.
        tile_f = min(f_lanes, 2048)
        if max_tile_f is not None:
            tile_f = min(tile_f, max(_LANE, (int(max_tile_f) // _LANE) * _LANE))
        avail = max(budget - 12 * tile_f, 4 * itemsize * tile_f * _SUBLANE)
        rows = max(_SUBLANE,
                   (avail // (4 * itemsize * tile_f)) // _SUBLANE * _SUBLANE)
        tile_b = min(rows, _round_up(b, _SUBLANE), _round_up(b_cap, _SUBLANE))

    if max_tile_f is not None:
        tile_f = min(tile_f, max(_LANE, (int(max_tile_f) // _LANE) * _LANE))
    return tile_b, tile_f


def dc_loss(output, target, *, max_tile_b=None, max_tile_f=None):
    """Pallas implementation of DCLoss.forward(output, target) -> scalar f32."""
    assert output.shape == target.shape, (output.shape, target.shape)
    b = int(output.shape[0])
    f = 1
    for d in output.shape[1:]:
        f *= int(d)
    f = max(f, 1)

    out2d = output.reshape(b, f)
    tgt2d = target.reshape(b, f)

    itemsize_o = jnp.dtype(output.dtype).itemsize
    itemsize_t = jnp.dtype(target.dtype).itemsize
    itemsize = max(itemsize_o, itemsize_t)

    vmem_limit, budget = _vmem_budgets()
    tile_b, tile_f = _choose_tiles(b, f, itemsize, budget, max_tile_b, max_tile_f)
    n_b = _cdiv(b, tile_b)
    n_f = _cdiv(f, tile_f)
    mask_rows = (n_b * tile_b) != b
    mask_cols = (n_f * tile_f) != f

    kernel = functools.partial(
        _dcloss_kernel,
        batch=b, feat=f, tile_b=tile_b, tile_f=tile_f, n_b=n_b,
        mask_rows=mask_rows, mask_cols=mask_cols)

    scratch_shapes = []
    if n_b > 1:
        scratch_shapes = [pltpu.VMEM((1, tile_f), jnp.float32)] * 3

    grid_spec = pltpu.PrefetchScalarGridSpec(
        num_scalar_prefetch=0,
        grid=(n_f, n_b),
        in_specs=[
            pl.BlockSpec((tile_b, tile_f), lambda fi, bi: (bi, fi)),
            pl.BlockSpec((tile_b, tile_f), lambda fi, bi: (bi, fi)),
        ],
        # Per-F-tile scalar partials, resident in SMEM across the inner B axis.
        out_specs=[
            pl.BlockSpec((1, 1), lambda fi, bi: (fi, 0), memory_space=pltpu.SMEM),
            pl.BlockSpec((1, 1), lambda fi, bi: (fi, 0), memory_space=pltpu.SMEM),
        ],
        scratch_shapes=scratch_shapes,
    )

    cost = pl.CostEstimate(
        flops=5 * b * f,
        transcendentals=0,
        bytes_accessed=b * f * (itemsize_o + itemsize_t) + 8 * n_f,
    )

    num_part, en_part = pl.pallas_call(
        kernel,
        out_shape=(
            jax.ShapeDtypeStruct((n_f, 1), jnp.float32),
            jax.ShapeDtypeStruct((n_f, 1), jnp.float32),
        ),
        grid_spec=grid_spec,
        compiler_params=pltpu.CompilerParams(
            # F tiles are independent -> "parallel" (v7x: both TensorCores
            # stream disjoint F ranges).  B carries the column accumulators
            # -> "arbitrary".
            dimension_semantics=("parallel", "arbitrary"),
            vmem_limit_bytes=vmem_limit,
        ),
        cost_estimate=cost,
    )(out2d, tgt2d)

    # Tiny finalize in plain JAX (n_f scalars per output).
    num_total = jnp.sum(num_part)            # sum_f (sum_b t - sum_b o)^2
    en_total = jnp.sum(en_part)              # sum_{b,f} t^2
    bf = float(b) * float(f)
    loss_num = num_total / (float(b) * float(b) * float(f))
    energy = en_total / bf + EPSILON
    return loss_num / energy


def dc_loss_ref(output, target):
    """Pure-JAX reference mirroring the PyTorch module."""
    diff = jnp.mean(target, axis=0) - jnp.mean(output, axis=0)
    loss = jnp.mean(diff ** 2)
    energy = jnp.mean(target ** 2) + EPSILON
    return loss / energy


if __name__ == "__main__":
    key = jax.random.PRNGKey(0)
    k1, k2, k3, k4, k5, k6 = jax.random.split(key, 6)

    # Primary: small NCHW-like output/target pair (single-block fast path).
    x_shape = (2, 4, 16, 16)
    output = jax.random.normal(k1, x_shape, dtype=jnp.float32)
    target = jax.random.normal(k2, x_shape, dtype=jnp.float32)
    loss = dc_loss(output, target)
    jax.block_until_ready(loss)
    ref = dc_loss_ref(output, target)
    assert jnp.allclose(loss, ref, rtol=1e-5, atol=1e-5), (loss, ref)

    # Non-lane-aligned F with forced small F tiles: exercises the multi-tile
    # "parallel" F axis and in-kernel column masking (no wrapper pad).
    y_shape = (2, 4, 18, 18)      # F = 1296 -> 6 tiles of 256, ragged last tile
    output2 = jax.random.normal(k3, y_shape, dtype=jnp.float32)
    target2 = jax.random.normal(k4, y_shape, dtype=jnp.float32)
    loss2 = dc_loss(output2, target2, max_tile_f=256)
    jax.block_until_ready(loss2)
    ref2 = dc_loss_ref(output2, target2)
    assert jnp.allclose(loss2, ref2, rtol=1e-5, atol=1e-5), (loss2, ref2)

    # Forced B tiling with ragged rows AND columns: exercises the inner
    # "arbitrary" B axis, VMEM column accumulators, and row masking.
    z_shape = (20, 5, 41)         # B = 20 -> 3 tiles of 8; F = 205 -> 2 tiles of 128
    output3 = jax.random.normal(k5, z_shape, dtype=jnp.float32)
    target3 = jax.random.normal(k6, z_shape, dtype=jnp.float32)
    loss3 = dc_loss(output3, target3, max_tile_b=8, max_tile_f=128)
    jax.block_until_ready(loss3)
    ref3 = dc_loss_ref(output3, target3)
    assert jnp.allclose(loss3, ref3, rtol=1e-5, atol=1e-5), (loss3, ref3)

    print("KERNEL_OK")
</pallas_src>

<mosaic_0001>
module attributes {stable_mosaic.version = 11 : i64} {
  func.func @_dcloss_kernel(%arg0: i32, %arg1: i32, %arg2: memref<2x1024xf32, #tpu.memory_space<vmem>>, %arg3: memref<2x1024xf32, #tpu.memory_space<vmem>>, %arg4: memref<1x1xf32, #tpu.memory_space<smem>>, %arg5: memref<1x1xf32, #tpu.memory_space<smem>>) attributes {dimension_semantics = [#tpu.dimension_semantics<parallel>, #tpu.dimension_semantics<arbitrary>], iteration_bounds = array<i64: 1, 1>, scalar_prefetch = 0 : i64, scratch_operands = 0 : i64, tpu.core_type = #tpu.core_type<tc>, window_params = [{transform_indices = @transform_0, window_bounds = array<i64: 2, 1024>}, {transform_indices = @transform_1, window_bounds = array<i64: 2, 1024>}, {transform_indices = @transform_2, window_bounds = array<i64: 1, 1>}, {transform_indices = @transform_3, window_bounds = array<i64: 1, 1>}]} {
    %c0 = arith.constant 0 : index
    %c0_0 = arith.constant 0 : index
    %0 = vector.load %arg2[%c0, %c0_0] : memref<2x1024xf32, #tpu.memory_space<vmem>>, vector<2x1024xf32>
    %c0_1 = arith.constant 0 : index
    %c0_2 = arith.constant 0 : index
    %1 = vector.load %arg3[%c0_1, %c0_2] : memref<2x1024xf32, #tpu.memory_space<vmem>>, vector<2x1024xf32>
    %cst = arith.constant dense<0.000000e+00> : vector<1024xf32>
    %2 = vector.multi_reduction <add>, %0, %cst [0] : vector<2x1024xf32> to vector<1024xf32>
    %3 = vector.shape_cast %2 : vector<1024xf32> to vector<1x1024xf32>
    %cst_3 = arith.constant dense<0.000000e+00> : vector<1024xf32>
    %4 = vector.multi_reduction <add>, %1, %cst_3 [0] : vector<2x1024xf32> to vector<1024xf32>
    %5 = vector.shape_cast %4 : vector<1024xf32> to vector<1x1024xf32>
    %6 = arith.mulf %1, %1 : vector<2x1024xf32>
    %cst_4 = arith.constant dense<0.000000e+00> : vector<1024xf32>
    %7 = vector.multi_reduction <add>, %6, %cst_4 [0] : vector<2x1024xf32> to vector<1024xf32>
    %8 = vector.shape_cast %7 : vector<1024xf32> to vector<1x1024xf32>
    %9 = arith.subf %5, %3 : vector<1x1024xf32>
    %10 = arith.mulf %9, %9 : vector<1x1024xf32>
    %11 = vector.shape_cast %10 : vector<1x1024xf32> to vector<1x1x1024xf32>
    %cst_5 = arith.constant dense<0.000000e+00> : vector<1xf32>
    %12 = vector.multi_reduction <add>, %11, %cst_5 [1, 2] : vector<1x1x1024xf32> to vector<1xf32>
    %13 = vector.shape_cast %12 : vector<1xf32> to vector<1x1x1xf32>
    %14 = vector.extract %13[0, 0, 0] : f32 from vector<1x1x1xf32>
    %c0_6 = arith.constant 0 : index
    %c0_7 = arith.constant 0 : index
    %15 = memref.load %arg4[%c0_6, %c0_7] : memref<1x1xf32, #tpu.memory_space<smem>>
    memref.store %14, %arg4[%c0_6, %c0_7] : memref<1x1xf32, #tpu.memory_space<smem>>
    %16 = vector.shape_cast %8 : vector<1x1024xf32> to vector<1x1x1024xf32>
    %cst_8 = arith.constant dense<0.000000e+00> : vector<1xf32>
    %17 = vector.multi_reduction <add>, %16, %cst_8 [1, 2] : vector<1x1x1024xf32> to vector<1xf32>
    %18 = vector.shape_cast %17 : vector<1xf32> to vector<1x1x1xf32>
    %19 = vector.extract %18[0, 0, 0] : f32 from vector<1x1x1xf32>
    %c0_9 = arith.constant 0 : index
    %c0_10 = arith.constant 0 : index
    %20 = memref.load %arg5[%c0_9, %c0_10] : memref<1x1xf32, #tpu.memory_space<smem>>
    memref.store %19, %arg5[%c0_9, %c0_10] : memref<1x1xf32, #tpu.memory_space<smem>>
    return
  }
  func.func @transform_0(%arg0: i32, %arg1: i32) -> (i32, i32) {
    %c0_i32 = arith.constant 0 : i32
    return %arg1, %arg0 : i32, i32
  }
  func.func @transform_1(%arg0: i32, %arg1: i32) -> (i32, i32) {
    %c0_i32 = arith.constant 0 : i32
    return %arg1, %arg0 : i32, i32
  }
  func.func @transform_2(%arg0: i32, %arg1: i32) -> (i32, i32) {
    %c0_i32 = arith.constant 0 : i32
    %c0_i32_0 = arith.constant 0 : i32
    return %arg0, %c0_i32 : i32, i32
  }
  func.func @transform_3(%arg0: i32, %arg1: i32) -> (i32, i32) {
    %c0_i32 = arith.constant 0 : i32
    %c0_i32_0 = arith.constant 0 : i32
    return %arg0, %c0_i32 : i32, i32
  }
}

</mosaic_0001>

<llo_original>
// kernel: tpu_custom_call.1
$region0: #{tpu_custom_call.1}
  #allocation0 [shape = 'u32[]', space=smem, size = 0x4, offset = 0x4, fixed_abs, tag = 'smem constant byte address 0x4 - core index']
  #allocation1 [shape = 'u32[144,128]{1,0:T(1,128)}', space=vmem, size = 0x12000, scoped, tag = 'internal scratch']
  %s0 = inlined_call_operand.hbm [shape: f32[2,1024], index: 0, kind: input, shape index: {}]
  %s1 = inlined_call_operand.hbm [shape: f32[2,1024], index: 1, kind: input, shape index: {}]
  %s2 = inlined_call_operand.hbm [shape: f32[1,1], index: 2, kind: output, shape index: {0}]
  %s3 = inlined_call_operand.hbm [shape: f32[1,1], index: 3, kind: output, shape index: {1}]
  %4 = xla_tuple %s2, %s3
  %s5 = sld [smem:[#allocation0]]
  $region34: #{tpu_custom_call.1} parent=0
    _
  %s7 = ssub.s32 1, %s5
  %s8 = scalar_select 0, %s7, %s5
  $region1: #{tpu_custom_call.1} parent=0
    #allocation2 [shape = 'u8[8192]{0}', space=vmem, size = 0x2000, scoped, tag = 'input window, operand 0, single buffered']
    #allocation3 [shape = 's32[1]{0}', space=sflag, size = 0x4, scoped, tag = 'scoped memory for tpu_custom_call.1']
    #allocation4 [shape = 's32[1]{0}', space=sflag, size = 0x4, scoped, tag = 'scoped memory for tpu_custom_call.1']
    #allocation5 [shape = 'u8[8192]{0}', space=vmem, size = 0x2000, scoped, tag = 'input window, operand 1, single buffered']
    #allocation6 [shape = 's32[1]{0}', space=sflag, size = 0x4, scoped, tag = 'scoped memory for tpu_custom_call.1']
    #allocation7 [shape = 'u8[512]{0}', space=smem, size = 0x200, scoped, tag = 'output window, operand 0, single buffered']
    #allocation8 [shape = 'u8[512]{0}', space=smem, size = 0x200, scoped, tag = 'output window, operand 1, single buffered']
    #allocation9 [shape = 's32[1]{0}', space=sflag, size = 0x4, scoped, tag = 'scoped memory for tpu_custom_call.1']
    %9 = vsyncpa [#allocation3], 0
    %10 = vsyncpa [#allocation6], 0
    %11 = vsyncpa [#allocation4], 0
    %12 = vsyncpa [#allocation9], 0
    // Predicated region
    $region2: #{tpu_custom_call.1} parent=1 // pred_check
      _
    $region3: #{tpu_custom_call.1} parent=1 // pred_check_branch
      %14 = sbr.rel (0) target = $region5
    $region4: #{tpu_custom_call.1} parent=1 // pred_region
      %s16 = ssub.s32 256, 256
      %17 = vsyncadd [#allocation3], %s16
      %s19 = sshll.u32 [#allocation2], 4
      %s20 = int_to_ptr.vmem [resolvable:$true] %s19
      %22 = dma.hbm_to_vmem [thread:$0]  %s0, 256, %s20, [#allocation3]
    $region5: #{tpu_custom_call.1} parent=1 // pred_fallthru
      _
    // Predicated region
    $region6: #{tpu_custom_call.1} parent=1 // pred_check
      _
    $region7: #{tpu_custom_call.1} parent=1 // pred_check_branch
      %24 = sbr.rel (0) target = $region9
    $region8: #{tpu_custom_call.1} parent=1 // pred_region
      %s26 = ssub.s32 256, 256
      %27 = vsyncadd [#allocation6], %s26
      %s29 = sshll.u32 [#allocation5], 4
      %s30 = int_to_ptr.vmem [resolvable:$true] %s29
      %32 = dma.hbm_to_vmem [thread:$0]  %s1, 256, %s30, [#allocation6]
    $region9: #{tpu_custom_call.1} parent=1 // pred_fallthru
      _
    // Predicated region
    $region10: #{tpu_custom_call.1} parent=1 // pred_check
      _
    $region11: #{tpu_custom_call.1} parent=1 // pred_check_branch
      %34 = sbr.rel (0) target = $region13
    $region12: #{tpu_custom_call.1} parent=1 // pred_region
      %35 = dma.done [#allocation3], 256
    $region13: #{tpu_custom_call.1} parent=1 // pred_fallthru
      _
    // Predicated region
    $region14: #{tpu_custom_call.1} parent=1 // pred_check
      _
    $region15: #{tpu_custom_call.1} parent=1 // pred_check_branch
      %37 = sbr.rel (0) target = $region17
    $region16: #{tpu_custom_call.1} parent=1 // pred_region
      %38 = dma.done [#allocation6], 256
    $region17: #{tpu_custom_call.1} parent=1 // pred_fallthru
      _
    %v39 = vld [vmem:[#allocation2] sm:$0xff]
    %v40 = vld [vmem:[#allocation2 + $0x8] sm:$0xff]
    %v41 = vld [vmem:[#allocation5] sm:$0xff]
    %v42 = vld [vmem:[#allocation5 + $0x8] sm:$0xff]
    %v45 = vcombine.high %v39, %v39
    %v47 = vunpack.c.l.s4 1983009808
    %v48 = vunpack.c.0.s8 %v47
    %v49 = vlaneseq
    %v50 = vshrl.u32 %v49, 7
    %v51 = vsub.s32 %v48, %v50
    %v52 = vrot.slane %v39, %v51
    %v54 = vunpack.c.l.s4 1983009808
    %v55 = vunpack.c.0.s8 %v54
    %v56 = vlaneseq
    %v57 = vshrl.u32 %v56, 7
    %v58 = vsub.s32 %v55, %v57
    %v59 = vrot.slane %v45, %v58
    %v60 = vcombine.high %v52, %v52
    %v61 = vcombine.high %v59, %v59
    %v62 = vcombine.high %v40, %v40
    %v64 = vunpack.c.l.s4 1983009808
    %v65 = vunpack.c.0.s8 %v64
    %v66 = vlaneseq
    %v67 = vshrl.u32 %v66, 7
    %v68 = vsub.s32 %v65, %v67
    %v69 = vrot.slane %v40, %v68
    %v71 = vunpack.c.l.s4 1983009808
    %v72 = vunpack.c.0.s8 %v71
    %v73 = vlaneseq
    %v74 = vshrl.u32 %v73, 7
    %v75 = vsub.s32 %v72, %v74
    %v76 = vrot.slane %v62, %v75
    %v77 = vcombine.high %v69, %v69
    %v78 = vcombine.high %v76, %v76
    %vm87 = vcmask 1041408
    %v88 = vsel %vm87, %v52, 0.0
    %v89 = vrot.slane %v88, 4
    %v90 = vadd.f32 %v88, %v89
    %v91 = vrot.slane %v90, 2
    %v92 = vadd.f32 %v90, %v91
    %v93 = vrot.slane %v92, 1
    %v94 = vadd.f32 %v92, %v93
    %v95 = vsel %vm87, %v60, 0.0
    %v96 = vrot.slane %v95, 4
    %v97 = vadd.f32 %v95, %v96
    %v98 = vrot.slane %v97, 2
    %v99 = vadd.f32 %v97, %v98
    %v100 = vrot.slane %v99, 1
    %v101 = vadd.f32 %v99, %v100
    %v102 = vsel %vm87, %v59, 0.0
    %v103 = vrot.slane %v102, 4
    %v104 = vadd.f32 %v102, %v103
    %v105 = vrot.slane %v104, 2
    %v106 = vadd.f32 %v104, %v105
    %v107 = vrot.slane %v106, 1
    %v108 = vadd.f32 %v106, %v107
    %v109 = vsel %vm87, %v61, 0.0
    %v110 = vrot.slane %v109, 4
    %v111 = vadd.f32 %v109, %v110
    %v112 = vrot.slane %v111, 2
    %v113 = vadd.f32 %v111, %v112
    %v114 = vrot.slane %v113, 1
    %v115 = vadd.f32 %v113, %v114
    %v116 = vsel %vm87, %v69, 0.0
    %v117 = vrot.slane %v116, 4
    %v118 = vadd.f32 %v116, %v117
    %v119 = vrot.slane %v118, 2
    %v120 = vadd.f32 %v118, %v119
    %v121 = vrot.slane %v120, 1
    %v122 = vadd.f32 %v120, %v121
    %v123 = vsel %vm87, %v77, 0.0
    %v124 = vrot.slane %v123, 4
    %v125 = vadd.f32 %v123, %v124
    %v126 = vrot.slane %v125, 2
    %v127 = vadd.f32 %v125, %v126
    %v128 = vrot.slane %v127, 1
    %v129 = vadd.f32 %v127, %v128
    %v130 = vsel %vm87, %v76, 0.0
    %v131 = vrot.slane %v130, 4
    %v132 = vadd.f32 %v130, %v131
    %v133 = vrot.slane %v132, 2
    %v134 = vadd.f32 %v132, %v133
    %v135 = vrot.slane %v134, 1
    %v136 = vadd.f32 %v134, %v135
    %v137 = vsel %vm87, %v78, 0.0
    %v138 = vrot.slane %v137, 4
    %v139 = vadd.f32 %v137, %v138
    %v140 = vrot.slane %v139, 2
    %v141 = vadd.f32 %v139, %v140
    %v142 = vrot.slane %v141, 1
    %v143 = vadd.f32 %v141, %v142
    %v146 = vcombine.high %v41, %v41
    %v148 = vunpack.c.l.s4 1983009808
    %v149 = vunpack.c.0.s8 %v148
    %v150 = vlaneseq
    %v151 = vshrl.u32 %v150, 7
    %v152 = vsub.s32 %v149, %v151
    %v153 = vrot.slane %v41, %v152
    %v155 = vunpack.c.l.s4 1983009808
    %v156 = vunpack.c.0.s8 %v155
    %v157 = vlaneseq
    %v158 = vshrl.u32 %v157, 7
    %v159 = vsub.s32 %v156, %v158
    %v160 = vrot.slane %v146, %v159
    %v161 = vcombine.high %v153, %v153
    %v162 = vcombine.high %v160, %v160
    %v163 = vcombine.high %v42, %v42
    %v165 = vunpack.c.l.s4 1983009808
    %v166 = vunpack.c.0.s8 %v165
    %v167 = vlaneseq
    %v168 = vshrl.u32 %v167, 7
    %v169 = vsub.s32 %v166, %v168
    %v170 = vrot.slane %v42, %v169
    %v172 = vunpack.c.l.s4 1983009808
    %v173 = vunpack.c.0.s8 %v172
    %v174 = vlaneseq
    %v175 = vshrl.u32 %v174, 7
    %v176 = vsub.s32 %v173, %v175
    %v177 = vrot.slane %v163, %v176
    %v178 = vcombine.high %v170, %v170
    %v179 = vcombine.high %v177, %v177
    %v188 = vsel %vm87, %v153, 0.0
    %v189 = vrot.slane %v188, 4
    %v190 = vadd.f32 %v188, %v189
    %v191 = vrot.slane %v190, 2
    %v192 = vadd.f32 %v190, %v191
    %v193 = vrot.slane %v192, 1
    %v194 = vadd.f32 %v192, %v193
    %v195 = vsel %vm87, %v161, 0.0
    %v196 = vrot.slane %v195, 4
    %v197 = vadd.f32 %v195, %v196
    %v198 = vrot.slane %v197, 2
    %v199 = vadd.f32 %v197, %v198
    %v200 = vrot.slane %v199, 1
    %v201 = vadd.f32 %v199, %v200
    %v202 = vsel %vm87, %v160, 0.0
    %v203 = vrot.slane %v202, 4
    %v204 = vadd.f32 %v202, %v203
    %v205 = vrot.slane %v204, 2
    %v206 = vadd.f32 %v204, %v205
    %v207 = vrot.slane %v206, 1
    %v208 = vadd.f32 %v206, %v207
    %v209 = vsel %vm87, %v162, 0.0
    %v210 = vrot.slane %v209, 4
    %v211 = vadd.f32 %v209, %v210
    %v212 = vrot.slane %v211, 2
    %v213 = vadd.f32 %v211, %v212
    %v214 = vrot.slane %v213, 1
    %v215 = vadd.f32 %v213, %v214
    %v216 = vsel %vm87, %v170, 0.0
    %v217 = vrot.slane %v216, 4
    %v218 = vadd.f32 %v216, %v217
    %v219 = vrot.slane %v218, 2
    %v220 = vadd.f32 %v218, %v219
    %v221 = vrot.slane %v220, 1
    %v222 = vadd.f32 %v220, %v221
    %v223 = vsel %vm87, %v178, 0.0
    %v224 = vrot.slane %v223, 4
    %v225 = vadd.f32 %v223, %v224
    %v226 = vrot.slane %v225, 2
    %v227 = vadd.f32 %v225, %v226
    %v228 = vrot.slane %v227, 1
    %v229 = vadd.f32 %v227, %v228
    %v230 = vsel %vm87, %v177, 0.0
    %v231 = vrot.slane %v230, 4
    %v232 = vadd.f32 %v230, %v231
    %v233 = vrot.slane %v232, 2
    %v234 = vadd.f32 %v232, %v233
    %v235 = vrot.slane %v234, 1
    %v236 = vadd.f32 %v234, %v235
    %v237 = vsel %vm87, %v179, 0.0
    %v238 = vrot.slane %v237, 4
    %v239 = vadd.f32 %v237, %v238
    %v240 = vrot.slane %v239, 2
    %v241 = vadd.f32 %v239, %v240
    %v242 = vrot.slane %v241, 1
    %v243 = vadd.f32 %v241, %v242
    %v244 = vmul.f32 %v41, %v41
    %v245 = vmul.f32 %v42, %v42
    %v248 = vcombine.high %v244, %v244
    %v250 = vunpack.c.l.s4 1983009808
    %v251 = vunpack.c.0.s8 %v250
    %v252 = vlaneseq
    %v253 = vshrl.u32 %v252, 7
    %v254 = vsub.s32 %v251, %v253
    %v255 = vrot.slane %v244, %v254
    %v257 = vunpack.c.l.s4 1983009808
    %v258 = vunpack.c.0.s8 %v257
    %v259 = vlaneseq
    %v260 = vshrl.u32 %v259, 7
    %v261 = vsub.s32 %v258, %v260
    %v262 = vrot.slane %v248, %v261
    %v263 = vcombine.high %v255, %v255
    %v264 = vcombine.high %v262, %v262
    %v265 = vcombine.high %v245, %v245
    %v267 = vunpack.c.l.s4 1983009808
    %v268 = vunpack.c.0.s8 %v267
    %v269 = vlaneseq
    %v270 = vshrl.u32 %v269, 7
    %v271 = vsub.s32 %v268, %v270
    %v272 = vrot.slane %v245, %v271
    %v274 = vunpack.c.l.s4 1983009808
    %v275 = vunpack.c.0.s8 %v274
    %v276 = vlaneseq
    %v277 = vshrl.u32 %v276, 7
    %v278 = vsub.s32 %v275, %v277
    %v279 = vrot.slane %v265, %v278
    %v280 = vcombine.high %v272, %v272
    %v281 = vcombine.high %v279, %v279
    %v290 = vsel %vm87, %v255, 0.0
    %v291 = vrot.slane %v290, 4
    %v292 = vadd.f32 %v290, %v291
    %v293 = vrot.slane %v292, 2
    %v294 = vadd.f32 %v292, %v293
    %v295 = vrot.slane %v294, 1
    %v296 = vadd.f32 %v294, %v295
    %v297 = vsel %vm87, %v263, 0.0
    %v298 = vrot.slane %v297, 4
    %v299 = vadd.f32 %v297, %v298
    %v300 = vrot.slane %v299, 2
    %v301 = vadd.f32 %v299, %v300
    %v302 = vrot.slane %v301, 1
    %v303 = vadd.f32 %v301, %v302
    %v304 = vsel %vm87, %v262, 0.0
    %v305 = vrot.slane %v304, 4
    %v306 = vadd.f32 %v304, %v305
    %v307 = vrot.slane %v306, 2
    %v308 = vadd.f32 %v306, %v307
    %v309 = vrot.slane %v308, 1
    %v310 = vadd.f32 %v308, %v309
    %v311 = vsel %vm87, %v264, 0.0
    %v312 = vrot.slane %v311, 4
    %v313 = vadd.f32 %v311, %v312
    %v314 = vrot.slane %v313, 2
    %v315 = vadd.f32 %v313, %v314
    %v316 = vrot.slane %v315, 1
    %v317 = vadd.f32 %v315, %v316
    %v318 = vsel %vm87, %v272, 0.0
    %v319 = vrot.slane %v318, 4
    %v320 = vadd.f32 %v318, %v319
    %v321 = vrot.slane %v320, 2
    %v322 = vadd.f32 %v320, %v321
    %v323 = vrot.slane %v322, 1
    %v324 = vadd.f32 %v322, %v323
    %v325 = vsel %vm87, %v280, 0.0
    %v326 = vrot.slane %v325, 4
    %v327 = vadd.f32 %v325, %v326
    %v328 = vrot.slane %v327, 2
    %v329 = vadd.f32 %v327, %v328
    %v330 = vrot.slane %v329, 1
    %v331 = vadd.f32 %v329, %v330
    %v332 = vsel %vm87, %v279, 0.0
    %v333 = vrot.slane %v332, 4
    %v334 = vadd.f32 %v332, %v333
    %v335 = vrot.slane %v334, 2
    %v336 = vadd.f32 %v334, %v335
    %v337 = vrot.slane %v336, 1
    %v338 = vadd.f32 %v336, %v337
    %v339 = vsel %vm87, %v281, 0.0
    %v340 = vrot.slane %v339, 4
    %v341 = vadd.f32 %v339, %v340
    %v342 = vrot.slane %v341, 2
    %v343 = vadd.f32 %v341, %v342
    %v344 = vrot.slane %v343, 1
    %v345 = vadd.f32 %v343, %v344
    %v346 = vsub.f32 %v194, %v94
    %v347 = vsub.f32 %v201, %v101
    %v348 = vsub.f32 %v208, %v108
    %v349 = vsub.f32 %v215, %v115
    %v350 = vsub.f32 %v222, %v122
    %v351 = vsub.f32 %v229, %v129
    %v352 = vsub.f32 %v236, %v136
    %v353 = vsub.f32 %v243, %v143
    %v354 = vmul.f32 %v346, %v346
    %v355 = vmul.f32 %v347, %v347
    %v356 = vmul.f32 %v348, %v348
    %v357 = vmul.f32 %v349, %v349
    %v358 = vmul.f32 %v350, %v350
    %v359 = vmul.f32 %v351, %v351
    %v360 = vmul.f32 %v352, %v352
    %v361 = vmul.f32 %v353, %v353
    %vm362 = vcmask 1040384
    %v363 = vsel %vm362, %v354, 0.0
    %v364 = vsel %vm362, %v355, 0.0
    %v365 = vadd.f32 %v363, %v364
    %v366 = vsel %vm362, %v356, 0.0
    %v367 = vadd.f32 %v365, %v366
    %v368 = vsel %vm362, %v357, 0.0
    %v369 = vadd.f32 %v367, %v368
    %v370 = vsel %vm362, %v358, 0.0
    %v371 = vadd.f32 %v369, %v370
    %v372 = vsel %vm362, %v359, 0.0
    %v373 = vadd.f32 %v371, %v372
    %v374 = vsel %vm362, %v360, 0.0
    %v375 = vadd.f32 %v373, %v374
    %v376 = vsel %vm362, %v361, 0.0
    %v377 = vadd.f32 %v375, %v376
    %378 = vadd.xlane.f32.xlu0 %v377
    %v379 = vpop.xlane.xlu0 %378
    %v380 = vrot.slane %v379, 4
    %v381 = vadd.f32 %v379, %v380
    %v382 = vrot.slane %v381, 2
    %v383 = vadd.f32 %v381, %v382
    %v384 = vrot.slane %v383, 1
    %v385 = vadd.f32 %v383, %v384
    %s386 = vtos %v385
    %s387 = scalar_lea.smem [#allocation7], 0
    %388 = sst [smem:[%s387]] %s386
    %v389 = vsel %vm362, %v296, 0.0
    %v390 = vsel %vm362, %v303, 0.0
    %v391 = vadd.f32 %v389, %v390
    %v392 = vsel %vm362, %v310, 0.0
    %v393 = vadd.f32 %v391, %v392
    %v394 = vsel %vm362, %v317, 0.0
    %v395 = vadd.f32 %v393, %v394
    %v396 = vsel %vm362, %v324, 0.0
    %v397 = vadd.f32 %v395, %v396
    %v398 = vsel %vm362, %v331, 0.0
    %v399 = vadd.f32 %v397, %v398
    %v400 = vsel %vm362, %v338, 0.0
    %v401 = vadd.f32 %v399, %v400
    %v402 = vsel %vm362, %v345, 0.0
    %v403 = vadd.f32 %v401, %v402
    %404 = vadd.xlane.f32.xlu0 %v403
    %v405 = vpop.xlane.xlu0 %404
    %v406 = vrot.slane %v405, 4
    %v407 = vadd.f32 %v405, %v406
    %v408 = vrot.slane %v407, 2
    %v409 = vadd.f32 %v407, %v408
    %v410 = vrot.slane %v409, 1
    %v411 = vadd.f32 %v409, %v410
    %s412 = vtos %v411
    %s413 = scalar_lea.smem [#allocation8], 0
    %414 = sst [smem:[%s413]] %s412
    // Predicated region
    $region18: #{tpu_custom_call.1} parent=1 // pred_check
      _
    $region19: #{tpu_custom_call.1} parent=1 // pred_check_branch
      %416 = sbr.rel (0) target = $region21
    $region20: #{tpu_custom_call.1} parent=1 // pred_region
      %s418 = ssub.s32 16, 16
      %419 = vsyncadd [#allocation4], %s418
      %422 = dma.smem_to_hbm [#allocation7], 16, %s2, [#allocation4]
    $region21: #{tpu_custom_call.1} parent=1 // pred_fallthru
      _
    // Predicated region
    $region22: #{tpu_custom_call.1} parent=1 // pred_check
      _
    $region23: #{tpu_custom_call.1} parent=1 // pred_check_branch
      %424 = sbr.rel (0) target = $region25
    $region24: #{tpu_custom_call.1} parent=1 // pred_region
      %s426 = ssub.s32 16, 16
      %427 = vsyncadd [#allocation9], %s426
      %430 = dma.smem_to_hbm [#allocation8], 16, %s3, [#allocation9]
    $region25: #{tpu_custom_call.1} parent=1 // pred_fallthru
      _
    // Predicated region
    $region26: #{tpu_custom_call.1} parent=1 // pred_check
      _
    $region27: #{tpu_custom_call.1} parent=1 // pred_check_branch
      %432 = sbr.rel (0) target = $region29
    $region28: #{tpu_custom_call.1} parent=1 // pred_region
      %433 = dma.done [#allocation4], 16
    $region29: #{tpu_custom_call.1} parent=1 // pred_fallthru
      _
    // Predicated region
    $region30: #{tpu_custom_call.1} parent=1 // pred_check
      _
    $region31: #{tpu_custom_call.1} parent=1 // pred_check_branch
      %435 = sbr.rel (0) target = $region33
    $region32: #{tpu_custom_call.1} parent=1 // pred_region
      %436 = dma.done [#allocation9], 16
    $region33: #{tpu_custom_call.1} parent=1 // pred_fallthru
      _
    %437 = sfence
    %438 = vsyncpa [#allocation3], 1
    %439 = vsyncpa [#allocation6], 1
    %440 = vsyncpa [#allocation4], 1
    %441 = vsyncpa [#allocation9], 1

</llo_original>
